<compile_context>
chip_gen: v5e
topology: v5e:2x2
jax: 0.10.0
libtpu: 0.0.40
codegen_flags: <defaults>
</compile_context>

<pallas_src>
import functools

import jax
import jax.numpy as jnp
from jax import lax
from jax.experimental import pallas as pl
from jax.experimental.pallas import tpu as pltpu


def _triplet_kernel(a_ref, p_ref, n_ref, out_ref, ap_acc, an_acc, *,
                    margin, feat_dim, block_d, mask_cols):
    k = pl.program_id(1)               # feature-axis (reduction) step
    nd = pl.num_programs(1)

    @pl.when(k == 0)
    def _():
        ap_acc[...] = jnp.zeros_like(ap_acc)
        an_acc[...] = jnp.zeros_like(an_acc)

    a = a_ref[...]
    p = p_ref[...]
    n = n_ref[...]
    if a.dtype != jnp.float32:
        a = a.astype(jnp.float32)
    if p.dtype != jnp.float32:
        p = p.astype(jnp.float32)
    if n.dtype != jnp.float32:
        n = n.astype(jnp.float32)

    if margin is None:
        dp = a - p
        dn = a - n
    else:
        eps = jnp.float32(1e-6)        # F.pairwise_distance default eps
        dp = a - p + eps
        dn = a - n + eps

    if mask_cols:
        # Last D tile may extend past the real feature dim: zero padded columns.
        cols = k * block_d + lax.broadcasted_iota(jnp.int32, dp.shape, 1)
        valid = cols < feat_dim
        dp = jnp.where(valid, dp, 0.0)
        dn = jnp.where(valid, dn, 0.0)

    ap_acc[...] += jnp.sum(dp * dp, axis=1, keepdims=True)   # [tm, 1]
    an_acc[...] += jnp.sum(dn * dn, axis=1, keepdims=True)   # [tm, 1]

    @pl.when(k == nd - 1)
    def _():
        ap = jnp.sqrt(ap_acc[...])
        an = jnp.sqrt(an_acc[...])
        if margin is None:
            # SoftMarginLoss with y=1, x = an - ap:  log(1 + exp(-x)) = softplus(ap - an)
            z = ap - an
            per_row = jnp.maximum(z, 0.0) + jnp.log1p(jnp.exp(-jnp.abs(z)))
        else:
            per_row = jnp.maximum(ap - an + jnp.float32(margin), 0.0)
        out_ref[...] = per_row


def triplet_loss_simple(anchor, pos, neg, *, margin=None,
                        block_rows=None, block_d=None):
    """Pallas equivalent of TripletLoss_simple(margin).forward(anchor, pos, neg)."""
    N, D = anchor.shape
    assert pos.shape == (N, D) and neg.shape == (N, D)

    itemsize = jnp.dtype(anchor.dtype).itemsize
    row_align = 16 if itemsize < 4 else 8     # bf16 packs 2 rows per sublane

    # Double-buffered-input VMEM budget (3 inputs x 2 buffers); 24 MiB keeps
    # plenty of headroom even on v7x's 64 MiB physical VMEM.
    BUDGET = 24 << 20

    if block_d is None:
        # Tile the feature axis only when even a 128-row tile with full D
        # would blow the budget (very wide features).
        if 6 * 128 * D * itemsize <= BUDGET:
            block_d = D
        else:
            block_d = 2048            # multiple of 128 -> natural lane tiling
    if block_rows is None:
        per_row_bytes = 6 * block_d * itemsize
        block_rows = (BUDGET // per_row_bytes) // row_align * row_align
        block_rows = int(max(row_align, min(1024, block_rows)))
    # Don't make the row tile larger than the (alignment-padded) batch.
    n_pad_min = ((N + row_align - 1) // row_align) * row_align
    block_rows = int(min(block_rows, n_pad_min))

    nr = pl.cdiv(N, block_rows)
    nd = pl.cdiv(D, block_d)
    n_pad = nr * block_rows
    mask_cols = (nd * block_d) > D

    kernel = functools.partial(_triplet_kernel, margin=margin, feat_dim=D,
                               block_d=block_d, mask_cols=mask_cols)

    in_spec = pl.BlockSpec((block_rows, block_d), lambda i, k: (i, k))
    out_spec = pl.BlockSpec((block_rows, 1), lambda i, k: (i, 0))

    io_bytes = 6 * block_rows * block_d * itemsize
    vmem_limit = int(min(96 << 20, max(32 << 20, 2 * io_bytes)))

    per_row = pl.pallas_call(
        kernel,
        out_shape=jax.ShapeDtypeStruct((n_pad, 1), jnp.float32),
        grid_spec=pltpu.PrefetchScalarGridSpec(
            num_scalar_prefetch=0,
            grid=(nr, nd),                          # reduction (D) axis last
            in_specs=[in_spec, in_spec, in_spec],
            out_specs=out_spec,
            scratch_shapes=[pltpu.VMEM((block_rows, 1), jnp.float32),
                            pltpu.VMEM((block_rows, 1), jnp.float32)],
        ),
        compiler_params=pltpu.CompilerParams(
            dimension_semantics=("parallel", "arbitrary"),
            vmem_limit_bytes=vmem_limit),
    )(anchor, pos, neg)

    # Padded rows (>= N) never enter the mean; divide by the true batch size.
    return jnp.sum(per_row[:N, 0]) / jnp.float32(N)


def triplet_loss_ref(anchor, pos, neg, margin=None):
    """Pure-JAX reference matching the PyTorch semantics."""
    if margin is None:
        ap = jnp.sqrt(jnp.sum((anchor - pos) ** 2, axis=1))
        an = jnp.sqrt(jnp.sum((anchor - neg) ** 2, axis=1))
        x = an - ap
        return jnp.mean(jnp.log1p(jnp.exp(-x)))
    eps = 1e-6
    ap = jnp.sqrt(jnp.sum((anchor - pos + eps) ** 2, axis=1))
    an = jnp.sqrt(jnp.sum((anchor - neg + eps) ** 2, axis=1))
    return jnp.mean(jnp.maximum(ap - an + margin, 0.0))


if __name__ == "__main__":
    key = jax.random.PRNGKey(0)
    ka, kp, kn = jax.random.split(key, 3)

    # Small shapes consistent with the module: batch=16 triplets, feature dim 32.
    N, D = 16, 32
    anchor = jax.random.normal(ka, (N, D), dtype=jnp.float32)
    pos = jax.random.normal(kp, (N, D), dtype=jnp.float32)
    neg = jax.random.normal(kn, (N, D), dtype=jnp.float32)

    # 1) Default construction: margin=None -> SoftMarginLoss path.
    loss_soft = jax.block_until_ready(triplet_loss_simple(anchor, pos, neg, margin=None))
    ref_soft = triplet_loss_ref(anchor, pos, neg, margin=None)
    assert jnp.allclose(loss_soft, ref_soft, rtol=1e-5, atol=1e-5), (loss_soft, ref_soft)

    # 2) Margin path: nn.TripletMarginLoss(margin=0.3, p=2).
    loss_margin = jax.block_until_ready(triplet_loss_simple(anchor, pos, neg, margin=0.3))
    ref_margin = triplet_loss_ref(anchor, pos, neg, margin=0.3)
    assert jnp.allclose(loss_margin, ref_margin, rtol=1e-5, atol=1e-5), (loss_margin, ref_margin)

    # 3) Ragged batch (N not a multiple of 8) + feature-axis tiling w/ column mask.
    N2, D2 = 12, 160
    a2 = jax.random.normal(ka, (N2, D2), dtype=jnp.float32)
    p2 = jax.random.normal(kp, (N2, D2), dtype=jnp.float32)
    n2 = jax.random.normal(kn, (N2, D2), dtype=jnp.float32)
    loss2 = jax.block_until_ready(
        triplet_loss_simple(a2, p2, n2, margin=None, block_rows=8, block_d=128))
    ref2 = triplet_loss_ref(a2, p2, n2, margin=None)
    assert jnp.allclose(loss2, ref2, rtol=1e-5, atol=1e-5), (loss2, ref2)

    print("KERNEL_OK")
</pallas_src>

<mosaic_0001>
module attributes {stable_mosaic.version = 11 : i64} {
  func.func @_triplet_kernel(%arg0: i32, %arg1: i32, %arg2: memref<16x32xf32, #tpu.memory_space<vmem>>, %arg3: memref<16x32xf32, #tpu.memory_space<vmem>>, %arg4: memref<16x32xf32, #tpu.memory_space<vmem>>, %arg5: memref<16x1xf32, #tpu.memory_space<vmem>>, %arg6: memref<16x1xf32, #tpu.memory_space<vmem>>, %arg7: memref<16x1xf32, #tpu.memory_space<vmem>>) attributes {dimension_semantics = [#tpu.dimension_semantics<parallel>, #tpu.dimension_semantics<arbitrary>], iteration_bounds = array<i64: 1, 1>, scalar_prefetch = 0 : i64, scratch_operands = 2 : i64, tpu.core_type = #tpu.core_type<tc>, window_params = [{transform_indices = @transform_0, window_bounds = array<i64: 16, 32>}, {transform_indices = @transform_1, window_bounds = array<i64: 16, 32>}, {transform_indices = @transform_2, window_bounds = array<i64: 16, 32>}, {transform_indices = @transform_3, window_bounds = array<i64: 16, 1>}]} {
    %c0_i32 = arith.constant 0 : i32
    %0 = arith.cmpi eq, %arg1, %c0_i32 : i32
    %1 = arith.extui %0 : i1 to i32
    %c0_i32_0 = arith.constant 0 : i32
    %2 = arith.cmpi ne, %1, %c0_i32_0 : i32
    scf.if %2 {
      %cst_17 = arith.constant 0.000000e+00 : f32
      %23 = vector.broadcast %cst_17 : f32 to vector<16x1xf32>
      %c0_18 = arith.constant 0 : index
      %c0_19 = arith.constant 0 : index
      %24 = vector.load %arg6[%c0_18, %c0_19] : memref<16x1xf32, #tpu.memory_space<vmem>>, vector<16x1xf32>
      tpu.vector_store %arg6[%c0_18, %c0_19], %23 {strides = array<i32>} : memref<16x1xf32, #tpu.memory_space<vmem>>, vector<16x1xf32>,
      %cst_20 = arith.constant 0.000000e+00 : f32
      %25 = vector.broadcast %cst_20 : f32 to vector<16x1xf32>
      %c0_21 = arith.constant 0 : index
      %c0_22 = arith.constant 0 : index
      %26 = vector.load %arg7[%c0_21, %c0_22] : memref<16x1xf32, #tpu.memory_space<vmem>>, vector<16x1xf32>
      tpu.vector_store %arg7[%c0_21, %c0_22], %25 {strides = array<i32>} : memref<16x1xf32, #tpu.memory_space<vmem>>, vector<16x1xf32>,
    } else {
    }
    %c0 = arith.constant 0 : index
    %c0_1 = arith.constant 0 : index
    %3 = vector.load %arg2[%c0, %c0_1] : memref<16x32xf32, #tpu.memory_space<vmem>>, vector<16x32xf32>
    %c0_2 = arith.constant 0 : index
    %c0_3 = arith.constant 0 : index
    %4 = vector.load %arg3[%c0_2, %c0_3] : memref<16x32xf32, #tpu.memory_space<vmem>>, vector<16x32xf32>
    %c0_4 = arith.constant 0 : index
    %c0_5 = arith.constant 0 : index
    %5 = vector.load %arg4[%c0_4, %c0_5] : memref<16x32xf32, #tpu.memory_space<vmem>>, vector<16x32xf32>
    %6 = arith.subf %3, %4 : vector<16x32xf32>
    %7 = arith.subf %3, %5 : vector<16x32xf32>
    %c0_6 = arith.constant 0 : index
    %c0_7 = arith.constant 0 : index
    %8 = vector.load %arg6[%c0_6, %c0_7] : memref<16x1xf32, #tpu.memory_space<vmem>>, vector<16x1xf32>
    %9 = arith.mulf %6, %6 : vector<16x32xf32>
    %cst = arith.constant dense<0.000000e+00> : vector<16xf32>
    %10 = vector.multi_reduction <add>, %9, %cst [1] : vector<16x32xf32> to vector<16xf32>
    %11 = vector.shape_cast %10 : vector<16xf32> to vector<16x1xf32>
    %12 = arith.addf %8, %11 : vector<16x1xf32>
    %c0_8 = arith.constant 0 : index
    %c0_9 = arith.constant 0 : index
    %13 = vector.load %arg6[%c0_8, %c0_9] : memref<16x1xf32, #tpu.memory_space<vmem>>, vector<16x1xf32>
    tpu.vector_store %arg6[%c0_8, %c0_9], %12 {strides = array<i32>} : memref<16x1xf32, #tpu.memory_space<vmem>>, vector<16x1xf32>,
    %c0_10 = arith.constant 0 : index
    %c0_11 = arith.constant 0 : index
    %14 = vector.load %arg7[%c0_10, %c0_11] : memref<16x1xf32, #tpu.memory_space<vmem>>, vector<16x1xf32>
    %15 = arith.mulf %7, %7 : vector<16x32xf32>
    %cst_12 = arith.constant dense<0.000000e+00> : vector<16xf32>
    %16 = vector.multi_reduction <add>, %15, %cst_12 [1] : vector<16x32xf32> to vector<16xf32>
    %17 = vector.shape_cast %16 : vector<16xf32> to vector<16x1xf32>
    %18 = arith.addf %14, %17 : vector<16x1xf32>
    %c0_13 = arith.constant 0 : index
    %c0_14 = arith.constant 0 : index
    %19 = vector.load %arg7[%c0_13, %c0_14] : memref<16x1xf32, #tpu.memory_space<vmem>>, vector<16x1xf32>
    tpu.vector_store %arg7[%c0_13, %c0_14], %18 {strides = array<i32>} : memref<16x1xf32, #tpu.memory_space<vmem>>, vector<16x1xf32>,
    %c0_i32_15 = arith.constant 0 : i32
    %20 = arith.cmpi eq, %arg1, %c0_i32_15 : i32
    %21 = arith.extui %20 : i1 to i32
    %c0_i32_16 = arith.constant 0 : i32
    %22 = arith.cmpi ne, %21, %c0_i32_16 : i32
    scf.if %22 {
      %c0_17 = arith.constant 0 : index
      %c0_18 = arith.constant 0 : index
      %23 = vector.load %arg6[%c0_17, %c0_18] : memref<16x1xf32, #tpu.memory_space<vmem>>, vector<16x1xf32>
      %24 = math.sqrt %23 : vector<16x1xf32>
      %c0_19 = arith.constant 0 : index
      %c0_20 = arith.constant 0 : index
      %25 = vector.load %arg7[%c0_19, %c0_20] : memref<16x1xf32, #tpu.memory_space<vmem>>, vector<16x1xf32>
      %26 = math.sqrt %25 : vector<16x1xf32>
      %27 = arith.subf %24, %26 : vector<16x1xf32>
      %cst_21 = arith.constant 0.000000e+00 : f32
      %28 = vector.broadcast %cst_21 : f32 to vector<16x1xf32>
      %29 = arith.maximumf %27, %28 : vector<16x1xf32>
      %30 = math.absf %27 : vector<16x1xf32>
      %cst_22 = arith.constant 0.000000e+00 : f32
      %31 = vector.broadcast %cst_22 : f32 to vector<16x1xf32>
      %32 = arith.subf %31, %30 : vector<16x1xf32>
      %33 = math.exp %32 : vector<16x1xf32>
      %34 = math.log1p %33 : vector<16x1xf32>
      %35 = arith.addf %29, %34 : vector<16x1xf32>
      %c0_23 = arith.constant 0 : index
      %c0_24 = arith.constant 0 : index
      %36 = vector.load %arg5[%c0_23, %c0_24] : memref<16x1xf32, #tpu.memory_space<vmem>>, vector<16x1xf32>
      tpu.vector_store %arg5[%c0_23, %c0_24], %35 {strides = array<i32>} : memref<16x1xf32, #tpu.memory_space<vmem>>, vector<16x1xf32>,
    } else {
    }
    return
  }
  func.func @transform_0(%arg0: i32, %arg1: i32) -> (i32, i32) {
    %c0_i32 = arith.constant 0 : i32
    return %arg0, %arg1 : i32, i32
  }
  func.func @transform_1(%arg0: i32, %arg1: i32) -> (i32, i32) {
    %c0_i32 = arith.constant 0 : i32
    return %arg0, %arg1 : i32, i32
  }
  func.func @transform_2(%arg0: i32, %arg1: i32) -> (i32, i32) {
    %c0_i32 = arith.constant 0 : i32
    return %arg0, %arg1 : i32, i32
  }
  func.func @transform_3(%arg0: i32, %arg1: i32) -> (i32, i32) {
    %c0_i32 = arith.constant 0 : i32
    %c0_i32_0 = arith.constant 0 : i32
    return %arg0, %c0_i32 : i32, i32
  }
}

</mosaic_0001>

<llo_original>
// kernel: tpu_custom_call.1
$region0: #{tpu_custom_call.1}
  #allocation0 [shape = 'u32[]', space=smem, size = 0x4, offset = 0x4, fixed_abs, tag = 'smem constant byte address 0x4 - core index']
  #allocation1 [shape = 'u32[72,128]{1,0:T(1,128)}', space=vmem, size = 0x9000, scoped, tag = 'internal scratch']
  #allocation2 [shape = 'f32[16,1]{1,0:T(8,128)}', space=vmem, size = 0x2000, scoped, tag = 'scratch operand']
  #allocation3 [shape = 'f32[16,1]{1,0:T(8,128)}', space=vmem, size = 0x2000, scoped, tag = 'scratch operand']
  %s0 = inlined_call_operand.hbm [shape: f32[16,32], index: 0, kind: input, shape index: {}]
  %s1 = inlined_call_operand.hbm [shape: f32[16,32], index: 1, kind: input, shape index: {}]
  %s2 = inlined_call_operand.hbm [shape: f32[16,32], index: 2, kind: input, shape index: {}]
  %s3 = inlined_call_operand.vmem [shape: f32[16,1], index: 3, kind: output, shape index: {}]
  %s4 = sld [smem:[#allocation0]]
  $region42: #{tpu_custom_call.1} parent=0
    _
  %s6 = ssub.s32 1, %s4
  %s7 = scalar_select 0, %s6, %s4
  $region1: #{tpu_custom_call.1} parent=0
    #allocation4 [shape = 'u8[8192]{0}', space=vmem, size = 0x2000, scoped, tag = 'input window, operand 0, single buffered']
    #allocation5 [shape = 's32[1]{0}', space=sflag, size = 0x4, scoped, tag = 'scoped memory for tpu_custom_call.1']
    #allocation6 [shape = 'u8[8192]{0}', space=vmem, size = 0x2000, scoped, tag = 'input window, operand 1, single buffered']
    #allocation7 [shape = 's32[1]{0}', space=sflag, size = 0x4, scoped, tag = 'scoped memory for tpu_custom_call.1']
    #allocation8 [shape = 'u8[8192]{0}', space=vmem, size = 0x2000, scoped, tag = 'input window, operand 2, single buffered']
    %8 = vsyncpa [#allocation5], 0
    %9 = vsyncpa [#allocation7], 0
    // Predicated region
    $region2: #{tpu_custom_call.1} parent=1 // pred_check
      _
    $region3: #{tpu_custom_call.1} parent=1 // pred_check_branch
      %11 = sbr.rel (0) target = $region5
    $region4: #{tpu_custom_call.1} parent=1 // pred_region
      %13 = vsyncadd [#allocation5], 0
      %s14 = sshll.u32 %s0, 4
      %s15 = int_to_ptr.hbm [resolvable:$true] %s14
      %s16 = sshll.u32 [#allocation4], 4
      %s17 = int_to_ptr.vmem [resolvable:$true] %s16
      %22 = dma.hbm_to_vmem [thread:$0]  %s15, 256, %s17, [#allocation5], 128, 128, 8
    $region5: #{tpu_custom_call.1} parent=1 // pred_fallthru
      _
    // Predicated region
    $region6: #{tpu_custom_call.1} parent=1 // pred_check
      _
    $region7: #{tpu_custom_call.1} parent=1 // pred_check_branch
      %24 = sbr.rel (0) target = $region9
    $region8: #{tpu_custom_call.1} parent=1 // pred_region
      %26 = vsyncadd [#allocation7], 0
      %s27 = sshll.u32 %s1, 4
      %s28 = int_to_ptr.hbm [resolvable:$true] %s27
      %s29 = sshll.u32 [#allocation6], 4
      %s30 = int_to_ptr.vmem [resolvable:$true] %s29
      %35 = dma.hbm_to_vmem [thread:$0]  %s28, 256, %s30, [#allocation7], 128, 128, 8
    $region9: #{tpu_custom_call.1} parent=1 // pred_fallthru
      _
    // Predicated region
    $region10: #{tpu_custom_call.1} parent=1 // pred_check
      _
    $region11: #{tpu_custom_call.1} parent=1 // pred_check_branch
      %37 = sbr.rel (0) target = $region13
    $region12: #{tpu_custom_call.1} parent=1 // pred_region
      %39 = vsyncadd [#allocation7], 0
      %s40 = sshll.u32 %s2, 4
      %s41 = int_to_ptr.hbm [resolvable:$true] %s40
      %s42 = sshll.u32 [#allocation8], 4
      %s43 = int_to_ptr.vmem [resolvable:$true] %s42
      %48 = dma.hbm_to_vmem [thread:$0]  %s41, 256, %s43, [#allocation7], 128, 128, 8
    $region13: #{tpu_custom_call.1} parent=1 // pred_fallthru
      _
    // Predicated region
    $region14: #{tpu_custom_call.1} parent=1 // pred_check
      _
    $region15: #{tpu_custom_call.1} parent=1 // pred_check_branch
      %50 = sbr.rel (0) target = $region17
    $region16: #{tpu_custom_call.1} parent=1 // pred_region
      %52 = dma.done [#allocation5], 256
    $region17: #{tpu_custom_call.1} parent=1 // pred_fallthru
      _
    // Predicated region
    $region18: #{tpu_custom_call.1} parent=1 // pred_check
      _
    $region19: #{tpu_custom_call.1} parent=1 // pred_check_branch
      %54 = sbr.rel (0) target = $region21
    $region20: #{tpu_custom_call.1} parent=1 // pred_region
      %56 = dma.done [#allocation7], 256
    $region21: #{tpu_custom_call.1} parent=1 // pred_fallthru
      _
    // Predicated region
    $region22: #{tpu_custom_call.1} parent=1 // pred_check
      _
    $region23: #{tpu_custom_call.1} parent=1 // pred_check_branch
      %58 = sbr.rel (0) target = $region25
    $region24: #{tpu_custom_call.1} parent=1 // pred_region
      %60 = dma.done [#allocation7], 256
    $region25: #{tpu_custom_call.1} parent=1 // pred_fallthru
      _
    %p61 = scmp.eq.s32.totalorder 0, 0
    // Predicated region
    $region26: #{tpu_custom_call.1} parent=1 // pred_check
      %p62 = pneg %p61
    $region27: #{tpu_custom_call.1} parent=1 // pred_check_branch
      %64 = sbr.rel (%p62) target = $region29
    $region28: #{tpu_custom_call.1} parent=1 // pred_region
      %vm65 = vcmask 7168
      %66 = vst.msk [vmem:[#allocation2] sm:$0xff] %vm65, 0.0
      %67 = vst.msk [vmem:[#allocation2 + $0x8] sm:$0xff] %vm65, 0.0
      %68 = vst.msk [vmem:[#allocation3] sm:$0xff] %vm65, 0.0
      %69 = vst.msk [vmem:[#allocation3 + $0x8] sm:$0xff] %vm65, 0.0
    $region29: #{tpu_custom_call.1} parent=1 // pred_fallthru
      _
    %v70 = vld [vmem:[#allocation4] sm:$0xff]
    %v71 = vld [vmem:[#allocation4 + $0x8] sm:$0xff]
    %v72 = vld [vmem:[#allocation6] sm:$0xff]
    %v73 = vld [vmem:[#allocation6 + $0x8] sm:$0xff]
    %v74 = vld [vmem:[#allocation8] sm:$0xff]
    %v75 = vld [vmem:[#allocation8 + $0x8] sm:$0xff]
    %v76 = vsub.f32 %v70, %v72
    %v77 = vsub.f32 %v71, %v73
    %v78 = vsub.f32 %v70, %v74
    %v79 = vsub.f32 %v71, %v75
    %v80 = vld [vmem:[#allocation2] sm:$0xff]
    %v81 = vld [vmem:[#allocation2 + $0x8] sm:$0xff]
    %v82 = vmul.f32 %v76, %v76
    %v83 = vmul.f32 %v77, %v77
    %vm84 = vcmask 261120
    %v85 = vsel %vm84, %v82, 0.0
    %86 = vadd.xlane.f32.xlu0 %v85
    %v87 = vpop.xlane.xlu0 %86
    %v88 = vsel %vm84, %v83, 0.0
    %89 = vadd.xlane.f32.xlu0 %v88
    %v90 = vpop.xlane.xlu0 %89
    %v91 = vadd.f32 %v80, %v87
    %v92 = vadd.f32 %v81, %v90
    %vm93 = vcmask 7168
    %94 = vst.msk [vmem:[#allocation2] sm:$0xff] %vm93, %v91
    %95 = vst.msk [vmem:[#allocation2 + $0x8] sm:$0xff] %vm93, %v92
    %v96 = vld [vmem:[#allocation3] sm:$0xff]
    %v97 = vld [vmem:[#allocation3 + $0x8] sm:$0xff]
    %v98 = vmul.f32 %v78, %v78
    %v99 = vmul.f32 %v79, %v79
    %v100 = vsel %vm84, %v98, 0.0
    %101 = vadd.xlane.f32.xlu0 %v100
    %v102 = vpop.xlane.xlu0 %101
    %v103 = vsel %vm84, %v99, 0.0
    %104 = vadd.xlane.f32.xlu0 %v103
    %v105 = vpop.xlane.xlu0 %104
    %v106 = vadd.f32 %v96, %v102
    %v107 = vadd.f32 %v97, %v105
    %108 = vst.msk [vmem:[#allocation3] sm:$0xff] %vm93, %v106
    %109 = vst.msk [vmem:[#allocation3 + $0x8] sm:$0xff] %vm93, %v107
    // Predicated region
    $region30: #{tpu_custom_call.1} parent=1 // pred_check
      %p110 = pneg %p61
    $region31: #{tpu_custom_call.1} parent=1 // pred_check_branch
      %112 = sbr.rel (%p110) target = $region33
    $region32: #{tpu_custom_call.1} parent=1 // pred_region
      %v113 = vld [vmem:[#allocation2] sm:$0xff]
      %v114 = vld [vmem:[#allocation2 + $0x8] sm:$0xff]
      %v115 = vrsqrt.pop %v113
      %v116 = vmul.f32 %v115, %v113
      %v117 = vmul.f32 %v116, %v115
      %v118 = vmul.f32 0.5, %v117
      %v119 = vsub.f32 1.5, %v118
      %v120 = vmul.f32 %v115, %v119
      %v121 = vmul.f32 %v113, %v120
      %vm122 = vcmp.eq.f32.partialorder %v113, inf
      %v123 = vsel %vm122, %v113, %v121
      %vm124 = vcmp.eq.f32.partialorder %v113, 0.0
      %v125 = vand.u32 %v113, 2147483648
      %v126 = vsel %vm124, %v125, %v123
      %v127 = vrsqrt.pop %v114
      %v128 = vmul.f32 %v127, %v114
      %v129 = vmul.f32 %v128, %v127
      %v130 = vmul.f32 0.5, %v129
      %v131 = vsub.f32 1.5, %v130
      %v132 = vmul.f32 %v127, %v131
      %v133 = vmul.f32 %v114, %v132
      %vm134 = vcmp.eq.f32.partialorder %v114, inf
      %v135 = vsel %vm134, %v114, %v133
      %vm136 = vcmp.eq.f32.partialorder %v114, 0.0
      %v137 = vand.u32 %v114, 2147483648
      %v138 = vsel %vm136, %v137, %v135
      %v139 = vld [vmem:[#allocation3] sm:$0xff]
      %v140 = vld [vmem:[#allocation3 + $0x8] sm:$0xff]
      %v141 = vrsqrt.pop %v139
      %v142 = vmul.f32 %v141, %v139
      %v143 = vmul.f32 %v142, %v141
      %v144 = vmul.f32 0.5, %v143
      %v145 = vsub.f32 1.5, %v144
      %v146 = vmul.f32 %v141, %v145
      %v147 = vmul.f32 %v139, %v146
      %vm148 = vcmp.eq.f32.partialorder %v139, inf
      %v149 = vsel %vm148, %v139, %v147
      %vm150 = vcmp.eq.f32.partialorder %v139, 0.0
      %v151 = vand.u32 %v139, 2147483648
      %v152 = vsel %vm150, %v151, %v149
      %v153 = vrsqrt.pop %v140
      %v154 = vmul.f32 %v153, %v140
      %v155 = vmul.f32 %v154, %v153
      %v156 = vmul.f32 0.5, %v155
      %v157 = vsub.f32 1.5, %v156
      %v158 = vmul.f32 %v153, %v157
      %v159 = vmul.f32 %v140, %v158
      %vm160 = vcmp.eq.f32.partialorder %v140, inf
      %v161 = vsel %vm160, %v140, %v159
      %vm162 = vcmp.eq.f32.partialorder %v140, 0.0
      %v163 = vand.u32 %v140, 2147483648
      %v164 = vsel %vm162, %v163, %v161
      %v165 = vsub.f32 %v126, %v152
      %v166 = vsub.f32 %v138, %v164
      %v167 = vmax.f32 %v165, 0.0
      %v168 = vmax.f32 %v166, 0.0
      %v169 = vand.u32 2147483647, %v165
      %v170 = vand.u32 2147483647, %v166
      %v171 = vsub.f32 0.0, %v169
      %v172 = vsub.f32 0.0, %v170
      %v173 = vmul.f32 %v171, 1.442695
      %v174 = vpow.pop %v173
      %v175 = vmul.f32 %v172, 1.442695
      %v176 = vpow.pop %v175
      %v177 = vadd.f32 %v174, 1.0
      %v178 = vlog2.pop %v177
      %v179 = vmul.f32 %v178, 0.6931472
      %v180 = vmul.f32 -0.5, %v174
      %v181 = vadd.f32 %v180, 1.0
      %v182 = vmul.f32 %v181, %v174
      %v183 = vand.u32 2147483647, %v174
      %vm184 = vcmp.lt.f32.partialorder %v183, 0.0004427343
      %v185 = vsel %vm184, %v182, %v179
      %v186 = vadd.f32 %v176, 1.0
      %v187 = vlog2.pop %v186
      %v188 = vmul.f32 %v187, 0.6931472
      %v189 = vmul.f32 -0.5, %v176
      %v190 = vadd.f32 %v189, 1.0
      %v191 = vmul.f32 %v190, %v176
      %v192 = vand.u32 2147483647, %v176
      %vm193 = vcmp.lt.f32.partialorder %v192, 0.0004427343
      %v194 = vsel %vm193, %v191, %v188
      %v195 = vadd.f32 %v167, %v185
      %v196 = vadd.f32 %v168, %v194
      %197 = vst.msk [vmem:[%s3] sm:$0xff] %vm93, %v195
      %198 = vst.msk [vmem:[%s3 + $0x8] sm:$0xff] %vm93, %v196
    $region33: #{tpu_custom_call.1} parent=1 // pred_fallthru
      _
    // Predicated region
    $region34: #{tpu_custom_call.1} parent=1 // pred_check
      _
    $region35: #{tpu_custom_call.1} parent=1 // pred_check_branch
      %200 = sbr.rel (0) target = $region37
    $region36: #{tpu_custom_call.1} parent=1 // pred_region
      _
    $region37: #{tpu_custom_call.1} parent=1 // pred_fallthru
      _
    // Predicated region
    $region38: #{tpu_custom_call.1} parent=1 // pred_check
      _
    $region39: #{tpu_custom_call.1} parent=1 // pred_check_branch
      %202 = sbr.rel (0) target = $region41
    $region40: #{tpu_custom_call.1} parent=1 // pred_region
      _
    $region41: #{tpu_custom_call.1} parent=1 // pred_fallthru
      _
    %203 = vsyncpa [#allocation5], 1
    %204 = vsyncpa [#allocation7], 1

</llo_original>
